<compile_context>
chip_gen: v5e
topology: v5e:2x2
jax: 0.10.0
libtpu: 0.0.40
codegen_flags: <defaults>
</compile_context>

<pallas_src>
import functools

import jax
import jax.numpy as jnp
from jax import lax
from jax.experimental import pallas as pl
from jax.experimental.pallas import tpu as pltpu

LANES = 128
# Accumulator rows: 8 independent f32 vreg add-chains; also a multiple of every
# dtype's sublane packing (8 f32 / 16 bf16 / 32 int8), so tile_rows (a multiple
# of ACC_ROWS) always keeps packed-vreg layouts.
ACC_ROWS = 64
TARGET_BLOCK_BYTES = 4 * 1024 * 1024      # ~4 MiB streaming block per buffer
VMEM_LIMIT_BYTES = 48 * 1024 * 1024       # below physical VMEM on all generations


def _round_up(x, m):
    return ((x + m - 1) // m) * m


def _is_v7x():
    """Best-effort chip detection: only v7x has 2 TensorCores per chip."""
    try:
        kind = jax.devices()[0].device_kind.lower()
    except Exception:
        return False
    return "v7" in kind


def _l1norm_kernel(x_ref, o_ref, *, n_rows, tile_rows, inner_steps,
                   mask_start_step, has_masked_steps):
    c = pl.program_id(0)   # "parallel" chunk axis (megacore sharding on v7x)
    j = pl.program_id(1)   # "arbitrary" reduction axis

    @pl.when(j == 0)
    def _():
        o_ref[...] = jnp.zeros_like(o_ref)

    # abs in the native dtype, widen to f32 only for accumulation.
    a = jnp.abs(x_ref[...]).astype(jnp.float32)            # (tile_rows, 128)

    def _accumulate(vals):
        # (ACC_ROWS, 128) resident accumulator -> 8 independent vreg add
        # chains instead of one; keeps the kernel DMA-bound even on v7x.
        o_ref[...] += vals.reshape(
            tile_rows // ACC_ROWS, ACC_ROWS, LANES).sum(axis=0)

    if has_masked_steps:
        step = c * inner_steps + j

        @pl.when(step < mask_start_step)
        def _():
            # Interior steps: pure abs + accumulate, no masking work at all.
            _accumulate(a)

        @pl.when(step >= mask_start_step)
        def _():
            # Partial last block and/or the (at most one) clamped duplicate
            # pad step: zero out rows beyond the logical array.
            # int32 row index is fine below ~2^31 rows (~2.7e11 elements).
            row = step * tile_rows + lax.broadcasted_iota(
                jnp.int32, (tile_rows, LANES), 0)
            _accumulate(jnp.where(row < n_rows, a, 0.0))
    else:
        _accumulate(a)


def l1norm(x):
    """Pallas equivalent of torch.norm(x, 1, 1).sum() -> scalar."""
    flat = x.reshape(-1)
    n = flat.shape[0]
    n_rows = n // LANES
    n_main = n_rows * LANES

    # Tiny tail (numel not a multiple of 128): reduce in plain JAX.
    tail = None
    if n_main != n:
        tail = jnp.sum(jnp.abs(flat[n_main:].astype(jnp.float32)))

    if n_rows == 0:
        return jnp.sum(jnp.abs(flat.astype(jnp.float32))).astype(x.dtype)

    x2d = (flat if n_main == n else flat[:n_main]).reshape(n_rows, LANES)

    # Block sizing: ~4 MiB per buffer regardless of dtype, rows a multiple of
    # ACC_ROWS (which also covers bf16/int8 sublane packing).
    itemsize = jnp.dtype(x.dtype).itemsize
    max_tile_rows = max(
        ACC_ROWS, _round_up(TARGET_BLOCK_BYTES // (LANES * itemsize), ACC_ROWS))
    tile_rows = min(max_tile_rows, _round_up(n_rows, ACC_ROWS))
    total_steps = pl.cdiv(n_rows, tile_rows)

    # Two disjoint chunks (one per TensorCore) only on v7x; single-TC chips
    # (v5e/v6e) use one chunk, so there is never a duplicated pad-step DMA.
    num_chunks = 2 if (_is_v7x() and total_steps >= 2) else 1
    inner_steps = pl.cdiv(total_steps, num_chunks)
    padded_steps = num_chunks * inner_steps          # exceeds total_steps by <= 1

    last_block_partial = (n_rows % tile_rows) != 0
    mask_start_step = total_steps - 1 if last_block_partial else total_steps
    has_masked_steps = padded_steps > mask_start_step

    def x_index_map(c, j):
        step = c * inner_steps + j
        if padded_steps != total_steps:
            # Clamp the single duplicated padding step onto the last real
            # block; its contribution is fully zeroed by the row mask.
            step = jnp.minimum(step, total_steps - 1)
        return (step, 0)

    kernel = functools.partial(
        _l1norm_kernel,
        n_rows=n_rows,
        tile_rows=tile_rows,
        inner_steps=inner_steps,
        mask_start_step=mask_start_step,
        has_masked_steps=has_masked_steps,
    )

    partials = pl.pallas_call(
        kernel,
        out_shape=jax.ShapeDtypeStruct((num_chunks * ACC_ROWS, LANES), jnp.float32),
        grid_spec=pltpu.PrefetchScalarGridSpec(
            num_scalar_prefetch=0,
            grid=(num_chunks, inner_steps),
            in_specs=[pl.BlockSpec((tile_rows, LANES), x_index_map)],
            out_specs=pl.BlockSpec((ACC_ROWS, LANES), lambda c, j: (c, 0)),
        ),
        compiler_params=pltpu.CompilerParams(
            dimension_semantics=("parallel", "arbitrary"),
            vmem_limit_bytes=VMEM_LIMIT_BYTES,
        ),
        cost_estimate=pl.CostEstimate(
            flops=2 * n,
            transcendentals=0,
            bytes_accessed=n * itemsize,
        ),
    )(x2d)

    total = jnp.sum(partials)   # tiny final reduce of (num_chunks*64, 128) partials
    if tail is not None:
        total = total + tail
    return total.astype(x.dtype)


if __name__ == "__main__":
    key = jax.random.PRNGKey(0)

    # Shape implied by the module's forward (NCHW): batch=2, channels=4, 16x16.
    x = jax.random.normal(key, (2, 4, 16, 16), dtype=jnp.float32)
    result = jax.block_until_ready(l1norm(x))
    ref = jnp.sum(jnp.sum(jnp.abs(x), axis=1))
    assert jnp.allclose(result, ref, rtol=1e-5, atol=1e-5), (result, ref)

    # Ragged shape: exercises the 128-lane tail + masked partial-block path.
    x2 = jax.random.normal(jax.random.PRNGKey(1), (3, 5, 7, 11), dtype=jnp.float32)
    result2 = jax.block_until_ready(l1norm(x2))
    ref2 = jnp.sum(jnp.sum(jnp.abs(x2), axis=1))
    assert jnp.allclose(result2, ref2, rtol=1e-5, atol=1e-5), (result2, ref2)

    # Multi-block path: n_rows = 16384 -> two 8192-row blocks (and, on v7x,
    # one block per TensorCore chunk).
    x3 = jax.random.normal(jax.random.PRNGKey(2), (1, 2, 1024, 1024), dtype=jnp.float32)
    result3 = jax.block_until_ready(l1norm(x3))
    ref3 = jnp.sum(jnp.sum(jnp.abs(x3), axis=1))
    assert jnp.allclose(result3, ref3, rtol=1e-4, atol=1e-2), (result3, ref3)

    print("KERNEL_OK")
</pallas_src>

<mosaic_0001>
module attributes {stable_mosaic.version = 11 : i64} {
  func.func @_l1norm_kernel(%arg0: i32, %arg1: i32, %arg2: memref<64x128xf32, #tpu.memory_space<vmem>>, %arg3: memref<64x128xf32, #tpu.memory_space<vmem>>) attributes {dimension_semantics = [#tpu.dimension_semantics<parallel>, #tpu.dimension_semantics<arbitrary>], iteration_bounds = array<i64: 1, 1>, scalar_prefetch = 0 : i64, scratch_operands = 0 : i64, tpu.core_type = #tpu.core_type<tc>, window_params = [{transform_indices = @transform_0, window_bounds = array<i64: 64, 128>}, {transform_indices = @transform_1, window_bounds = array<i64: 64, 128>}]} {
    %c0_i32 = arith.constant 0 : i32
    %0 = arith.cmpi eq, %arg1, %c0_i32 : i32
    %1 = arith.extui %0 : i1 to i32
    %c0_i32_0 = arith.constant 0 : i32
    %2 = arith.cmpi ne, %1, %c0_i32_0 : i32
    scf.if %2 {
      %cst = arith.constant 0.000000e+00 : f32
      %13 = vector.broadcast %cst : f32 to vector<64x128xf32>
      %c0_6 = arith.constant 0 : index
      %c0_7 = arith.constant 0 : index
      %14 = vector.load %arg3[%c0_6, %c0_7] : memref<64x128xf32, #tpu.memory_space<vmem>>, vector<64x128xf32>
      tpu.vector_store %arg3[%c0_6, %c0_7], %13 {strides = array<i32>} : memref<64x128xf32, #tpu.memory_space<vmem>>, vector<64x128xf32>,
    } else {
    }
    %c0 = arith.constant 0 : index
    %c0_1 = arith.constant 0 : index
    %3 = vector.load %arg2[%c0, %c0_1] : memref<64x128xf32, #tpu.memory_space<vmem>>, vector<64x128xf32>
    %4 = math.absf %3 : vector<64x128xf32>
    %c1_i32 = arith.constant 1 : i32
    %5 = arith.muli %arg0, %c1_i32 : i32
    %6 = arith.addi %5, %arg1 : i32
    %c0_i32_2 = arith.constant 0 : i32
    %7 = arith.cmpi slt, %6, %c0_i32_2 : i32
    %8 = arith.extui %7 : i1 to i32
    %c0_i32_3 = arith.constant 0 : i32
    %9 = arith.cmpi ne, %8, %c0_i32_3 : i32
    scf.if %9 {
      %c0_6 = arith.constant 0 : index
      %c0_7 = arith.constant 0 : index
      %13 = vector.load %arg3[%c0_6, %c0_7] : memref<64x128xf32, #tpu.memory_space<vmem>>, vector<64x128xf32>
      %14 = vector.shape_cast %4 : vector<64x128xf32> to vector<1x64x128xf32>
      %cst = arith.constant dense<0.000000e+00> : vector<64x128xf32>
      %15 = vector.multi_reduction <add>, %14, %cst [0] : vector<1x64x128xf32> to vector<64x128xf32>
      %16 = arith.addf %13, %15 : vector<64x128xf32>
      %c0_8 = arith.constant 0 : index
      %c0_9 = arith.constant 0 : index
      %17 = vector.load %arg3[%c0_8, %c0_9] : memref<64x128xf32, #tpu.memory_space<vmem>>, vector<64x128xf32>
      tpu.vector_store %arg3[%c0_8, %c0_9], %16 {strides = array<i32>} : memref<64x128xf32, #tpu.memory_space<vmem>>, vector<64x128xf32>,
    } else {
    }
    %c0_i32_4 = arith.constant 0 : i32
    %10 = arith.cmpi sge, %6, %c0_i32_4 : i32
    %11 = arith.extui %10 : i1 to i32
    %c0_i32_5 = arith.constant 0 : i32
    %12 = arith.cmpi ne, %11, %c0_i32_5 : i32
    scf.if %12 {
      %c64_i32 = arith.constant 64 : i32
      %13 = arith.muli %6, %c64_i32 : i32
      %14 = tpu.iota {dimensions = array<i32: 0>} : vector<64x128xi32>
      %15 = vector.broadcast %13 : i32 to vector<64x128xi32>
      %16 = arith.addi %15, %14 : vector<64x128xi32>
      %c16_i32 = arith.constant 16 : i32
      %17 = vector.broadcast %c16_i32 : i32 to vector<64x128xi32>
      %18 = arith.cmpi slt, %16, %17 : vector<64x128xi32>
      %cst = arith.constant 0.000000e+00 : f32
      %19 = vector.broadcast %cst : f32 to vector<64x128xf32>
      %20 = arith.select %18, %4, %19 : vector<64x128xi1>, vector<64x128xf32>
      %c0_6 = arith.constant 0 : index
      %c0_7 = arith.constant 0 : index
      %21 = vector.load %arg3[%c0_6, %c0_7] : memref<64x128xf32, #tpu.memory_space<vmem>>, vector<64x128xf32>
      %22 = vector.shape_cast %20 : vector<64x128xf32> to vector<1x64x128xf32>
      %cst_8 = arith.constant dense<0.000000e+00> : vector<64x128xf32>
      %23 = vector.multi_reduction <add>, %22, %cst_8 [0] : vector<1x64x128xf32> to vector<64x128xf32>
      %24 = arith.addf %21, %23 : vector<64x128xf32>
      %c0_9 = arith.constant 0 : index
      %c0_10 = arith.constant 0 : index
      %25 = vector.load %arg3[%c0_9, %c0_10] : memref<64x128xf32, #tpu.memory_space<vmem>>, vector<64x128xf32>
      tpu.vector_store %arg3[%c0_9, %c0_10], %24 {strides = array<i32>} : memref<64x128xf32, #tpu.memory_space<vmem>>, vector<64x128xf32>,
    } else {
    }
    return
  }
  func.func @transform_0(%arg0: i32, %arg1: i32) -> (i32, i32) {
    %c1_i32 = arith.constant 1 : i32
    %0 = arith.muli %arg0, %c1_i32 : i32
    %1 = arith.addi %0, %arg1 : i32
    %c0_i32 = arith.constant 0 : i32
    %c0_i32_0 = arith.constant 0 : i32
    return %1, %c0_i32 : i32, i32
  }
  func.func @transform_1(%arg0: i32, %arg1: i32) -> (i32, i32) {
    %c0_i32 = arith.constant 0 : i32
    %c0_i32_0 = arith.constant 0 : i32
    return %arg0, %c0_i32 : i32, i32
  }
}

</mosaic_0001>

<llo_original>
// kernel: tpu_custom_call.1
$region0: #{tpu_custom_call.1}
  #allocation0 [shape = 'u32[]', space=smem, size = 0x4, offset = 0x4, fixed_abs, tag = 'smem constant byte address 0x4 - core index']
  #allocation1 [shape = 'u32[72,128]{1,0:T(1,128)}', space=vmem, size = 0x9000, scoped, tag = 'internal scratch']
  %s0 = inlined_call_operand.hbm [shape: f32[16,128], index: 0, kind: input, shape index: {}]
  %s1 = inlined_call_operand.hbm [shape: f32[64,128], index: 1, kind: output, shape index: {}]
  %s2 = sld [smem:[#allocation0]]
  $region30: #{tpu_custom_call.1} parent=0
    _
  %s4 = ssub.s32 1, %s2
  %s5 = scalar_select 0, %s4, %s2
  $region1: #{tpu_custom_call.1} parent=0
    #allocation2 [shape = 'u8[32768]{0}', space=vmem, size = 0x8000, scoped, tag = 'input window, operand 0, single buffered']
    #allocation3 [shape = 's32[1]{0}', space=sflag, size = 0x4, scoped, tag = 'scoped memory for tpu_custom_call.1']
    #allocation4 [shape = 's32[1]{0}', space=sflag, size = 0x4, scoped, tag = 'scoped memory for tpu_custom_call.1']
    #allocation5 [shape = 'u8[32768]{0}', space=vmem, size = 0x8000, scoped, tag = 'output window, operand 0, single buffered']
    %6 = vsyncpa [#allocation3], 0
    %7 = vsyncpa [#allocation4], 0
    // Predicated region
    $region2: #{tpu_custom_call.1} parent=1 // pred_check
      _
    $region3: #{tpu_custom_call.1} parent=1 // pred_check_branch
      %9 = sbr.rel (0) target = $region5
    $region4: #{tpu_custom_call.1} parent=1 // pred_region
      %s10 = sadd.s32 0, 0
      %s11 = smul.u32 8, %s10
      %s12 = ssub.s32 2, %s11
      %s13 = smul.u32 8, %s12
      %s14 = ssub.s32 64, %s13
      %s15 = sshll.u32 %s14, 4
      %16 = vsyncadd [#allocation3], %s15
      %p17 = scmp.ne.s32.totalorder 0, %s13
      %s18 = smul.addr %s11, 8
      %s19 = scalar_lea.hbm %s0, %s18
      %s20 = smul.u32 8, %s12
      %s21 = sshll.u32 %s19, 4
      %s22 = int_to_ptr.hbm [resolvable:$true] %s21
      %s23 = sshll.u32 [#allocation2], 4
      %s24 = int_to_ptr.vmem [resolvable:$true] %s23
      %s25 = sshll.u32 %s20, 4
      %29 = dma.hbm_to_vmem [thread:$0]  (%p17), %s22, %s25, %s24, [#allocation3], 128, 128, 8
    $region5: #{tpu_custom_call.1} parent=1 // pred_fallthru
      _
    // Predicated region
    $region6: #{tpu_custom_call.1} parent=1 // pred_check
      _
    $region7: #{tpu_custom_call.1} parent=1 // pred_check_branch
      %31 = sbr.rel (0) target = $region9
    $region8: #{tpu_custom_call.1} parent=1 // pred_region
      %33 = dma.done [#allocation3], 1024
    $region9: #{tpu_custom_call.1} parent=1 // pred_fallthru
      _
    %s34 = sadd.s32 0, 0
    %s35 = smul.u32 8, %s34
    %s36 = ssub.s32 2, %s35
    %s37 = smul.u32 8, %s36
    %p38 = scmp.eq.s32.totalorder 0, 0
    // Predicated region
    $region10: #{tpu_custom_call.1} parent=1 // pred_check
      %p39 = pneg %p38
    $region11: #{tpu_custom_call.1} parent=1 // pred_check_branch
      %41 = sbr.rel (%p39) target = $region13
    $region12: #{tpu_custom_call.1} parent=1 // pred_region
      %42 = vst [vmem:[#allocation5] sm:$0xff] 0.0
      %43 = vst [vmem:[#allocation5 + $0x8] sm:$0xff] 0.0
      %44 = vst [vmem:[#allocation5 + $0x10] sm:$0xff] 0.0
      %45 = vst [vmem:[#allocation5 + $0x18] sm:$0xff] 0.0
      %46 = vst [vmem:[#allocation5 + $0x20] sm:$0xff] 0.0
      %47 = vst [vmem:[#allocation5 + $0x28] sm:$0xff] 0.0
      %48 = vst [vmem:[#allocation5 + $0x30] sm:$0xff] 0.0
      %49 = vst [vmem:[#allocation5 + $0x38] sm:$0xff] 0.0
    $region13: #{tpu_custom_call.1} parent=1 // pred_fallthru
      _
    %v50 = vld [vmem:[#allocation2] sm:$0xff]
    %v51 = vld [vmem:[#allocation2 + $0x8] sm:$0xff]
    %v52 = vld [vmem:[#allocation2 + $0x10] sm:$0xff]
    %v53 = vld [vmem:[#allocation2 + $0x18] sm:$0xff]
    %v54 = vld [vmem:[#allocation2 + $0x20] sm:$0xff]
    %v55 = vld [vmem:[#allocation2 + $0x28] sm:$0xff]
    %v56 = vld [vmem:[#allocation2 + $0x30] sm:$0xff]
    %v57 = vld [vmem:[#allocation2 + $0x38] sm:$0xff]
    %v58 = vand.u32 2147483647, %v50
    %v59 = vand.u32 2147483647, %v51
    %v60 = vand.u32 2147483647, %v52
    %v61 = vand.u32 2147483647, %v53
    %v62 = vand.u32 2147483647, %v54
    %v63 = vand.u32 2147483647, %v55
    %v64 = vand.u32 2147483647, %v56
    %v65 = vand.u32 2147483647, %v57
    %s66 = sadd.s32 0, 0
    %p67 = scmp.lt.s32.totalorder %s66, 0
    // Predicated region
    $region14: #{tpu_custom_call.1} parent=1 // pred_check
      %p68 = pneg %p67
    $region15: #{tpu_custom_call.1} parent=1 // pred_check_branch
      %70 = sbr.rel (%p68) target = $region17
    $region16: #{tpu_custom_call.1} parent=1 // pred_region
      %v71 = vld [vmem:[#allocation5] sm:$0xff]
      %v72 = vld [vmem:[#allocation5 + $0x8] sm:$0xff]
      %v73 = vld [vmem:[#allocation5 + $0x10] sm:$0xff]
      %v74 = vld [vmem:[#allocation5 + $0x18] sm:$0xff]
      %v75 = vld [vmem:[#allocation5 + $0x20] sm:$0xff]
      %v76 = vld [vmem:[#allocation5 + $0x28] sm:$0xff]
      %v77 = vld [vmem:[#allocation5 + $0x30] sm:$0xff]
      %v78 = vld [vmem:[#allocation5 + $0x38] sm:$0xff]
      %v79 = vadd.f32 %v58, 0.0
      %v80 = vadd.f32 %v59, 0.0
      %v81 = vadd.f32 %v60, 0.0
      %v82 = vadd.f32 %v61, 0.0
      %v83 = vadd.f32 %v62, 0.0
      %v84 = vadd.f32 %v63, 0.0
      %v85 = vadd.f32 %v64, 0.0
      %v86 = vadd.f32 %v65, 0.0
      %v87 = vadd.f32 %v71, %v79
      %v88 = vadd.f32 %v72, %v80
      %v89 = vadd.f32 %v73, %v81
      %v90 = vadd.f32 %v74, %v82
      %v91 = vadd.f32 %v75, %v83
      %v92 = vadd.f32 %v76, %v84
      %v93 = vadd.f32 %v77, %v85
      %v94 = vadd.f32 %v78, %v86
      %95 = vst [vmem:[#allocation5] sm:$0xff] %v87
      %96 = vst [vmem:[#allocation5 + $0x8] sm:$0xff] %v88
      %97 = vst [vmem:[#allocation5 + $0x10] sm:$0xff] %v89
      %98 = vst [vmem:[#allocation5 + $0x18] sm:$0xff] %v90
      %99 = vst [vmem:[#allocation5 + $0x20] sm:$0xff] %v91
      %100 = vst [vmem:[#allocation5 + $0x28] sm:$0xff] %v92
      %101 = vst [vmem:[#allocation5 + $0x30] sm:$0xff] %v93
      %102 = vst [vmem:[#allocation5 + $0x38] sm:$0xff] %v94
    $region17: #{tpu_custom_call.1} parent=1 // pred_fallthru
      _
    %p103 = scmp.ge.s32.totalorder %s66, 0
    // Predicated region
    $region18: #{tpu_custom_call.1} parent=1 // pred_check
      %p104 = pneg %p103
    $region19: #{tpu_custom_call.1} parent=1 // pred_check_branch
      %106 = sbr.rel (%p104) target = $region21
    $region20: #{tpu_custom_call.1} parent=1 // pred_region
      %s107 = smul.u32 %s66, 64
      %v108 = vlaneseq
      %v109 = vshrl.u32 %v108, 7
      %v110 = vadd.s32 %v109, 8
      %v111 = vadd.s32 %v109, 16
      %v112 = vadd.s32 %v109, 24
      %v113 = vadd.s32 %v109, 32
      %v114 = vadd.s32 %v109, 40
      %v115 = vadd.s32 %v109, 48
      %v116 = vadd.s32 %v109, 56
      %v117 = vstv %s107
      %v118 = vadd.s32 %v117, %v109
      %v119 = vadd.s32 %v117, %v110
      %v120 = vadd.s32 %v117, %v111
      %v121 = vadd.s32 %v117, %v112
      %v122 = vadd.s32 %v117, %v113
      %v123 = vadd.s32 %v117, %v114
      %v124 = vadd.s32 %v117, %v115
      %v125 = vadd.s32 %v117, %v116
      %vm126 = vcmp.lt.s32.totalorder %v118, 16
      %vm127 = vcmp.lt.s32.totalorder %v119, 16
      %vm128 = vcmp.lt.s32.totalorder %v120, 16
      %vm129 = vcmp.lt.s32.totalorder %v121, 16
      %vm130 = vcmp.lt.s32.totalorder %v122, 16
      %vm131 = vcmp.lt.s32.totalorder %v123, 16
      %vm132 = vcmp.lt.s32.totalorder %v124, 16
      %vm133 = vcmp.lt.s32.totalorder %v125, 16
      %v134 = vsel %vm126, %v58, 0.0
      %v135 = vsel %vm127, %v59, 0.0
      %v136 = vsel %vm128, %v60, 0.0
      %v137 = vsel %vm129, %v61, 0.0
      %v138 = vsel %vm130, %v62, 0.0
      %v139 = vsel %vm131, %v63, 0.0
      %v140 = vsel %vm132, %v64, 0.0
      %v141 = vsel %vm133, %v65, 0.0
      %v142 = vld [vmem:[#allocation5] sm:$0xff]
      %v143 = vld [vmem:[#allocation5 + $0x8] sm:$0xff]
      %v144 = vld [vmem:[#allocation5 + $0x10] sm:$0xff]
      %v145 = vld [vmem:[#allocation5 + $0x18] sm:$0xff]
      %v146 = vld [vmem:[#allocation5 + $0x20] sm:$0xff]
      %v147 = vld [vmem:[#allocation5 + $0x28] sm:$0xff]
      %v148 = vld [vmem:[#allocation5 + $0x30] sm:$0xff]
      %v149 = vld [vmem:[#allocation5 + $0x38] sm:$0xff]
      %v150 = vadd.f32 %v134, 0.0
      %v151 = vadd.f32 %v135, 0.0
      %v152 = vadd.f32 %v136, 0.0
      %v153 = vadd.f32 %v137, 0.0
      %v154 = vadd.f32 %v138, 0.0
      %v155 = vadd.f32 %v139, 0.0
      %v156 = vadd.f32 %v140, 0.0
      %v157 = vadd.f32 %v141, 0.0
      %v158 = vadd.f32 %v142, %v150
      %v159 = vadd.f32 %v143, %v151
      %v160 = vadd.f32 %v144, %v152
      %v161 = vadd.f32 %v145, %v153
      %v162 = vadd.f32 %v146, %v154
      %v163 = vadd.f32 %v147, %v155
      %v164 = vadd.f32 %v148, %v156
      %v165 = vadd.f32 %v149, %v157
      %166 = vst [vmem:[#allocation5] sm:$0xff] %v158
      %167 = vst [vmem:[#allocation5 + $0x8] sm:$0xff] %v159
      %168 = vst [vmem:[#allocation5 + $0x10] sm:$0xff] %v160
      %169 = vst [vmem:[#allocation5 + $0x18] sm:$0xff] %v161
      %170 = vst [vmem:[#allocation5 + $0x20] sm:$0xff] %v162
      %171 = vst [vmem:[#allocation5 + $0x28] sm:$0xff] %v163
      %172 = vst [vmem:[#allocation5 + $0x30] sm:$0xff] %v164
      %173 = vst [vmem:[#allocation5 + $0x38] sm:$0xff] %v165
    $region21: #{tpu_custom_call.1} parent=1 // pred_fallthru
      _
    // Predicated region
    $region22: #{tpu_custom_call.1} parent=1 // pred_check
      _
    $region23: #{tpu_custom_call.1} parent=1 // pred_check_branch
      %175 = sbr.rel (0) target = $region25
    $region24: #{tpu_custom_call.1} parent=1 // pred_region
      %177 = vsyncadd [#allocation4], 0
      %s178 = sshll.u32 [#allocation5], 4
      %s179 = int_to_ptr.vmem [resolvable:$true] %s178
      %s180 = sshll.u32 %s1, 4
      %s181 = int_to_ptr.hbm [resolvable:$true] %s180
      %186 = dma.vmem_to_hbm [thread:$0]  %s179, 1024, %s181, [#allocation4], 128, 128, 8
    $region25: #{tpu_custom_call.1} parent=1 // pred_fallthru
      _
    // Predicated region
    $region26: #{tpu_custom_call.1} parent=1 // pred_check
      _
    $region27: #{tpu_custom_call.1} parent=1 // pred_check_branch
      %188 = sbr.rel (0) target = $region29
    $region28: #{tpu_custom_call.1} parent=1 // pred_region
      %190 = dma.done [#allocation4], 1024
    $region29: #{tpu_custom_call.1} parent=1 // pred_fallthru
      _
    %191 = vsyncpa [#allocation3], 1
    %192 = vsyncpa [#allocation4], 1

</llo_original>
